<compile_context>
chip_gen: v6e
topology: v6e:2x2x1
jax: 0.10.0
libtpu: 0.0.40
codegen_flags: <defaults>
</compile_context>

<pallas_src>
import functools

import jax
import jax.numpy as jnp
from jax.experimental import pallas as pl
from jax.experimental.pallas import tpu as pltpu


def _round_up(a, m):
    return ((a + m - 1) // m) * m


def _target_block_bytes():
    """Generation-aware per-block byte target.

    BlockSpec double-buffers both the x tile and the out tile, so the VMEM budget is
    ~4x this value (+ one small slope tile). Targets stay under each generation's
    scoped-VMEM default (v5e 16 MiB, v6e/v7x 32 MiB) so no vmem_limit_bytes override
    is required.
    """
    try:
        vmem = pltpu.get_tpu_info().vmem_capacity_bytes
    except Exception:
        vmem = 128 << 20
    if vmem <= (64 << 20):
        return 6 << 20      # v7x: 64 MiB physical, 32 MiB scoped default -> ~24 MiB budget
    return 3 << 20          # v5e/v6e: 128 MiB physical; stay under v5e's 16 MiB default


def _choose_tiles(B, F_pad, itemsize, pack, target_block_bytes, max_tile_f=4096):
    """Pick (tile_b, tile_f): lane-dense feature tiles, ~target-sized, pack-aligned rows."""
    tile_f = min(F_pad, max_tile_f)                      # F_pad is a multiple of 128
    rows = target_block_bytes // max(1, tile_f * itemsize)
    rows = max(pack, (rows // pack) * pack)              # sublane-pack aligned row count
    if B < 2 * pack:
        return B, tile_f                                 # single full-dim batch block
    # Always keep >= 2 batch blocks: balances v7x's two TensorCores and keeps the
    # BlockSpec pipeline double-buffered even when the whole array fits one target block.
    half = _round_up(pl.cdiv(B, 2), pack)
    return min(rows, half), tile_f


def _learnable_sigmoid_kernel(x_ref, slope_ref, o_ref, *, beta, apply_beta, fast):
    x = x_ref[...].astype(jnp.float32)      # (tile_b, tile_f), compute in f32
    z = slope_ref[...] * x                  # slope (1, tile_f) f32, sublane-broadcast
    if fast:
        # Single-transcendental form: sigmoid(z) = 0.5 * (1 + tanh(z/2)).
        # One EUP op/elem (tanh) + cheap VPU mul/add -> stays HBM-bound on v7x.
        s = 0.5 * (jnp.tanh(0.5 * z) + 1.0)
    else:
        s = jax.nn.sigmoid(z)               # exact, matches torch.sigmoid
    if apply_beta:
        s = beta * s
    o_ref[...] = s.astype(o_ref.dtype)


def learnable_sigmoid(x, slope, beta=1.0, *, out_dtype=None, tile_b=None, tile_f=None,
                      fast_sigmoid=False):
    """x: [B, F], slope: [F] -> beta * sigmoid(slope * x), shape [B, F]."""
    B, F = x.shape
    assert slope.shape == (F,), f"slope must be shape ({F},), got {slope.shape}"
    out_dtype = x.dtype if out_dtype is None else jnp.dtype(out_dtype)

    # Lane-dense padding: make the feature axis a multiple of 128 so output stores are
    # unmasked vst (the biggest single lever for streaming kernels). Slice back after.
    F_pad = _round_up(F, 128)
    slope_f32 = slope.astype(jnp.float32)   # keep the learnable parameter in f32
    if F_pad != F:
        x = jnp.pad(x, ((0, 0), (0, F_pad - F)))
        slope_f32 = jnp.pad(slope_f32, (0, F_pad - F))
    slope2d = slope_f32.reshape(1, F_pad)

    itemsize = max(x.dtype.itemsize, out_dtype.itemsize)
    # Sublane packing of the narrowest streamed dtype: 8 (f32), 16 (bf16), 32 (i8/fp8).
    pack = max(8, 32 // min(x.dtype.itemsize, out_dtype.itemsize))

    auto_b, auto_f = _choose_tiles(B, F_pad, itemsize, pack, _target_block_bytes())
    tile_b = auto_b if tile_b is None else tile_b
    tile_f = auto_f if tile_f is None else tile_f

    # Layout legality: block dims must be multiples of (8, 128) or equal the full dim.
    assert tile_b == B or tile_b % 8 == 0, "tile_b must be a multiple of 8 or equal B"
    assert tile_f % 128 == 0, "tile_f must be a multiple of 128"

    # Feature axis OUTER, batch axis INNER: the slope block index only changes when the
    # outer (feature) index changes, so slope is NOT re-fetched per batch block.
    grid = (pl.cdiv(F_pad, tile_f), pl.cdiv(B, tile_b))

    # NOTE: beta is a plain Python float in the reference module; it is baked in at trace
    # time here. TODO(synk): accept a traced beta (SMEM scalar) if it ever becomes learnable.
    kernel = functools.partial(
        _learnable_sigmoid_kernel,
        beta=float(beta),
        apply_beta=(float(beta) != 1.0),
        fast=fast_sigmoid,
    )

    out = pl.pallas_call(
        kernel,
        out_shape=jax.ShapeDtypeStruct((B, F_pad), out_dtype),
        grid_spec=pltpu.PrefetchScalarGridSpec(
            num_scalar_prefetch=0,
            grid=grid,
            in_specs=[
                pl.BlockSpec((tile_b, tile_f), lambda f, b: (b, f)),  # streaming x tile
                pl.BlockSpec((1, tile_f), lambda f, b: (0, f)),       # slope: resident over
                                                                      # the inner batch sweep
            ],
            out_specs=pl.BlockSpec((tile_b, tile_f), lambda f, b: (b, f)),
        ),
        compiler_params=pltpu.CompilerParams(
            dimension_semantics=("parallel", "parallel"),
        ),
    )(x, slope2d)

    return out[:, :F] if F_pad != F else out


if __name__ == "__main__":
    key = jax.random.PRNGKey(0)
    k1, k2, k3, k4 = jax.random.split(key, 4)

    # --- Small shape matching the module's [batch, in_features] contract.
    #     F=32 is not 128-aligned -> exercises the lane-padding path. ---
    B, F, beta = 8, 32, 1.2
    x = jax.random.normal(k1, (B, F), dtype=jnp.float32)
    # nn.Parameter(torch.ones(in_features)) init, perturbed so per-feature scaling matters.
    slope = jnp.ones((F,), dtype=jnp.float32) + 0.01 * jnp.arange(F, dtype=jnp.float32)

    out = jax.block_until_ready(learnable_sigmoid(x, slope, beta=beta))
    ref = beta * jax.nn.sigmoid(slope[None, :] * x)
    assert out.shape == (B, F)
    assert jnp.allclose(out, ref, atol=1e-6, rtol=1e-6)

    # --- Multi-block grid: explicit small tiles force (feature_blocks=2, batch_blocks=3)
    #     and exercise the resident-slope grid ordering. ---
    B2, F2, beta2 = 48, 200, 2.0
    x2 = jax.random.normal(k2, (B2, F2), dtype=jnp.float32)
    slope2 = 1.0 + 0.1 * jax.random.normal(k3, (F2,), dtype=jnp.float32)
    out2 = jax.block_until_ready(
        learnable_sigmoid(x2, slope2, beta=beta2, tile_b=16, tile_f=128)
    )
    ref2 = beta2 * jax.nn.sigmoid(slope2[None, :] * x2)
    assert out2.shape == (B2, F2)
    assert jnp.allclose(out2, ref2, atol=1e-6, rtol=1e-6)

    # --- Auto-tiled path + single-transcendental sigmoid + bf16 output (write-bandwidth
    #     saving option); looser tolerance for the bf16 cast. ---
    out3 = jax.block_until_ready(
        learnable_sigmoid(x2, slope2, beta=beta2, fast_sigmoid=True,
                          out_dtype=jnp.bfloat16)
    )
    assert out3.dtype == jnp.bfloat16
    assert jnp.allclose(out3.astype(jnp.float32), ref2, atol=2e-2, rtol=2e-2)

    print("KERNEL_OK")
</pallas_src>

<mosaic_0001>
module attributes {stable_mosaic.version = 11 : i64} {
  func.func @_learnable_sigmoid_kernel(%arg0: i32, %arg1: i32, %arg2: memref<8x128xf32, #tpu.memory_space<vmem>>, %arg3: memref<1x128xf32, #tpu.memory_space<vmem>>, %arg4: memref<8x128xf32, #tpu.memory_space<vmem>>) attributes {dimension_semantics = [#tpu.dimension_semantics<parallel>, #tpu.dimension_semantics<parallel>], iteration_bounds = array<i64: 1, 1>, scalar_prefetch = 0 : i64, scratch_operands = 0 : i64, tpu.core_type = #tpu.core_type<tc>, window_params = [{transform_indices = @transform_0, window_bounds = array<i64: 8, 128>}, {transform_indices = @transform_1, window_bounds = array<i64: 1, 128>}, {transform_indices = @transform_2, window_bounds = array<i64: 8, 128>}]} {
    %c0 = arith.constant 0 : index
    %c0_0 = arith.constant 0 : index
    %0 = vector.load %arg2[%c0, %c0_0] : memref<8x128xf32, #tpu.memory_space<vmem>>, vector<8x128xf32>
    %c0_1 = arith.constant 0 : index
    %c0_2 = arith.constant 0 : index
    %1 = vector.load %arg3[%c0_1, %c0_2] : memref<1x128xf32, #tpu.memory_space<vmem>>, vector<1x128xf32>
    %2 = vector.broadcast %1 : vector<1x128xf32> to vector<8x128xf32>
    %3 = arith.mulf %2, %0 : vector<8x128xf32>
    %4 = arith.negf %3 : vector<8x128xf32>
    %5 = math.exp %4 : vector<8x128xf32>
    %cst = arith.constant 1.000000e+00 : f32
    %6 = vector.broadcast %cst : f32 to vector<8x128xf32>
    %7 = arith.addf %6, %5 : vector<8x128xf32>
    %8 = arith.divf %6, %7 : vector<8x128xf32>
    %cst_3 = arith.constant 1.200000e+00 : f32
    %9 = vector.broadcast %cst_3 : f32 to vector<8x128xf32>
    %10 = arith.mulf %9, %8 : vector<8x128xf32>
    %c0_4 = arith.constant 0 : index
    %c0_5 = arith.constant 0 : index
    %11 = vector.load %arg4[%c0_4, %c0_5] : memref<8x128xf32, #tpu.memory_space<vmem>>, vector<8x128xf32>
    tpu.vector_store %arg4[%c0_4, %c0_5], %10 {strides = array<i32>} : memref<8x128xf32, #tpu.memory_space<vmem>>, vector<8x128xf32>,
    return
  }
  func.func @transform_0(%arg0: i32, %arg1: i32) -> (i32, i32) {
    %c0_i32 = arith.constant 0 : i32
    return %arg1, %arg0 : i32, i32
  }
  func.func @transform_1(%arg0: i32, %arg1: i32) -> (i32, i32) {
    %c0_i32 = arith.constant 0 : i32
    %c0_i32_0 = arith.constant 0 : i32
    return %c0_i32, %arg0 : i32, i32
  }
  func.func @transform_2(%arg0: i32, %arg1: i32) -> (i32, i32) {
    %c0_i32 = arith.constant 0 : i32
    return %arg1, %arg0 : i32, i32
  }
}

</mosaic_0001>

<llo_original>
// kernel: tpu_custom_call.1
$region0: #{tpu_custom_call.1}
  #allocation0 [shape = 'u32[]', space=smem, size = 0x4, offset = 0x4, fixed_abs, tag = 'smem constant byte address 0x4 - core index']
  #allocation1 [shape = 'u32[144,128]{1,0:T(1,128)}', space=vmem, size = 0x12000, scoped, tag = 'internal scratch']
  %s0 = inlined_call_operand.hbm [shape: f32[8,128], index: 0, kind: input, shape index: {}]
  %s1 = inlined_call_operand.vmem [shape: f32[1,128], index: 1, kind: input, shape index: {}]
  %s2 = inlined_call_operand.hbm [shape: f32[8,128], index: 2, kind: output, shape index: {}]
  %s3 = sld [smem:[#allocation0]]
  $region22: #{tpu_custom_call.1} parent=0
    _
  %s5 = ssub.s32 1, %s3
  %s6 = scalar_select 0, %s5, %s3
  $region1: #{tpu_custom_call.1} parent=0
    #allocation2 [shape = 'u8[4096]{0}', space=vmem, size = 0x1000, scoped, tag = 'input window, operand 0, single buffered']
    #allocation3 [shape = 's32[1]{0}', space=sflag, size = 0x4, scoped, tag = 'scoped memory for tpu_custom_call.1']
    #allocation4 [shape = 's32[1]{0}', space=sflag, size = 0x4, scoped, tag = 'scoped memory for tpu_custom_call.1']
    #allocation5 [shape = 'u8[4096]{0}', space=vmem, size = 0x1000, scoped, tag = 'output window, operand 0, single buffered']
    %7 = vsyncpa [#allocation3], 0
    %8 = vsyncpa [#allocation4], 0
    // Predicated region
    $region2: #{tpu_custom_call.1} parent=1 // pred_check
      _
    $region3: #{tpu_custom_call.1} parent=1 // pred_check_branch
      %10 = sbr.rel (0) target = $region5
    $region4: #{tpu_custom_call.1} parent=1 // pred_region
      %s12 = ssub.s32 128, 128
      %13 = vsyncadd [#allocation3], %s12
      %s15 = sshll.u32 [#allocation2], 4
      %s16 = int_to_ptr.vmem [resolvable:$true] %s15
      %18 = dma.hbm_to_vmem [thread:$0]  %s0, 128, %s16, [#allocation3]
    $region5: #{tpu_custom_call.1} parent=1 // pred_fallthru
      _
    // Predicated region
    $region6: #{tpu_custom_call.1} parent=1 // pred_check
      _
    $region7: #{tpu_custom_call.1} parent=1 // pred_check_branch
      %20 = sbr.rel (0) target = $region9
    $region8: #{tpu_custom_call.1} parent=1 // pred_region
      _
    $region9: #{tpu_custom_call.1} parent=1 // pred_fallthru
      _
    // Predicated region
    $region10: #{tpu_custom_call.1} parent=1 // pred_check
      _
    $region11: #{tpu_custom_call.1} parent=1 // pred_check_branch
      %22 = sbr.rel (0) target = $region13
    $region12: #{tpu_custom_call.1} parent=1 // pred_region
      %23 = dma.done [#allocation3], 128
    $region13: #{tpu_custom_call.1} parent=1 // pred_fallthru
      _
    %v24 = vld [vmem:[#allocation2] sm:$0xff]
    %v25 = vld [vmem:[%s1] sm:$0x1]
    %v27 = vlaneseq
    %v28 = vshrl.u32 %v27, 7
    %v29 = vsub.s32 0, %v28
    %v30 = vrot.slane %v25, %v29
    %v32 = vmul.f32 %v30, %v24
    %v33 = vxor.u32 %v32, 2147483648
    %v34 = vmul.f32 %v33, 1.442695
    %v35 = vpow.pop %v34
    %v36 = vadd.f32 %v35, 1.0
    %v37 = vrcp.pop %v36
    %v38 = vmul.f32 1.0, %v37
    %v39 = vmul.f32 %v38, 1.2
    %40 = vst [vmem:[#allocation5] sm:$0xff] %v39
    // Predicated region
    $region14: #{tpu_custom_call.1} parent=1 // pred_check
      _
    $region15: #{tpu_custom_call.1} parent=1 // pred_check_branch
      %42 = sbr.rel (0) target = $region17
    $region16: #{tpu_custom_call.1} parent=1 // pred_region
      %s44 = ssub.s32 128, 128
      %45 = vsyncadd [#allocation4], %s44
      %s47 = sshll.u32 [#allocation5], 4
      %s48 = int_to_ptr.vmem [resolvable:$true] %s47
      %50 = dma.vmem_to_hbm [thread:$0]  %s48, 128, %s2, [#allocation4]
    $region17: #{tpu_custom_call.1} parent=1 // pred_fallthru
      _
    // Predicated region
    $region18: #{tpu_custom_call.1} parent=1 // pred_check
      _
    $region19: #{tpu_custom_call.1} parent=1 // pred_check_branch
      %52 = sbr.rel (0) target = $region21
    $region20: #{tpu_custom_call.1} parent=1 // pred_region
      %53 = dma.done [#allocation4], 128
    $region21: #{tpu_custom_call.1} parent=1 // pred_fallthru
      _
    %54 = vsyncpa [#allocation3], 1
    %55 = vsyncpa [#allocation4], 1

</llo_original>
